<compile_context>
chip_gen: v6e
topology: v6e:2x2x1
jax: 0.10.0
libtpu: 0.0.40
codegen_flags: <defaults>
</compile_context>

<pallas_src>
import math

import jax
import jax.numpy as jnp
from jax.experimental import pallas as pl
from jax.experimental.pallas import tpu as pltpu


def _round_up(v, m):
    return (v + m - 1) // m * m


def _gru_cell_kernel(xh_ref, h_ref, w_ref, b_ref, out_ref):
    """Fused GRU cell update on one batch tile.

    xh_ref : (TB, Kp)      [x | h] rows (zero padded on both axes)
    h_ref  : (TB, Hp)      previous hidden state (zero padded)
    w_ref  : (Kp, 4*Hp)    packed weights  [r | i | n_x | n_h]
    b_ref  : (1, 4*Hp)     packed biases   [bx_r+bh_r | bx_i+bh_i | bx_n | bh_n]
    out_ref: (TB, Hp)      new hidden state
    """
    hp = h_ref.shape[-1]

    # Single MXU push: all four gate column blocks at once, f32 accumulation.
    gates = jnp.dot(xh_ref[...], w_ref[...],
                    preferred_element_type=jnp.float32) + b_ref[...]

    # Gate blocks are each a multiple of 128 lanes wide -> aligned, free views.
    r_pre = gates[:, 0 * hp:1 * hp]      # x@wx_r + h@wh_r + bx_r + bh_r
    i_pre = gates[:, 1 * hp:2 * hp]      # x@wx_i + h@wh_i + bx_i + bh_i
    n_x = gates[:, 2 * hp:3 * hp]        # x@wx_n + bx_n
    n_h = gates[:, 3 * hp:4 * hp]        # h@wh_n + bh_n

    resetgate = jax.nn.sigmoid(r_pre)
    inputgate = jax.nn.sigmoid(i_pre)
    newgate = jnp.tanh(n_x + resetgate * n_h)

    h = h_ref[...].astype(jnp.float32)
    hy = newgate + inputgate * (h - newgate)
    out_ref[...] = hy.astype(out_ref.dtype)


def gru_cell(x, hidden, wx_t, bx, wh_t, bh, *, block_b=256):
    """Pallas GRU cell (matches torch GRUCell.forward).

    x:      (B, input_size)
    hidden: (B, hidden_size)
    wx_t:   (input_size, 3*hidden_size)   transposed x2h weight
    bx:     (1, 3*hidden_size)
    wh_t:   (hidden_size, 3*hidden_size)  transposed h2h weight
    bh:     (1, 3*hidden_size)
    """
    B, I = x.shape
    B2, H = hidden.shape
    assert B == B2, "batch mismatch between x and hidden"

    f32 = jnp.float32
    Hp = _round_up(H, 128)                          # lane-aligned gate width
    K = I + H
    Kp = _round_up(K, 8)                            # sublane-aligned contraction
    TB = min(_round_up(B, 8), _round_up(block_b, 8))  # batch tile (mult of 8)
    Bp = _round_up(B, TB)                           # padded batch

    # ---- Repack parameters (layout plumbing, done once per call) ----
    wx_r, wx_i, wx_n = wx_t[:, :H], wx_t[:, H:2 * H], wx_t[:, 2 * H:]
    wh_r, wh_i, wh_n = wh_t[:, :H], wh_t[:, H:2 * H], wh_t[:, 2 * H:]
    bx_r, bx_i, bx_n = bx[:, :H], bx[:, H:2 * H], bx[:, 2 * H:]
    bh_r, bh_i, bh_n = bh[:, :H], bh[:, H:2 * H], bh[:, 2 * H:]

    def pad_cols(a):
        a = a.astype(f32)
        return jnp.pad(a, ((0, 0), (0, Hp - a.shape[1])))

    zx = jnp.zeros((I, H), f32)
    zh = jnp.zeros((H, H), f32)
    # rows 0:I -> x path, rows I:I+H -> h path; columns = [r | i | n_x | n_h]
    w_top = jnp.concatenate(
        [pad_cols(wx_r), pad_cols(wx_i), pad_cols(wx_n), pad_cols(zx)], axis=1)
    w_bot = jnp.concatenate(
        [pad_cols(wh_r), pad_cols(wh_i), pad_cols(zh), pad_cols(wh_n)], axis=1)
    w = jnp.concatenate([w_top, w_bot], axis=0)          # (K, 4*Hp)
    w = jnp.pad(w, ((0, Kp - K), (0, 0)))                # (Kp, 4*Hp)

    # r/i biases only ever appear summed -> pre-sum them in the wrapper.
    b = jnp.concatenate(
        [pad_cols(bx_r + bh_r), pad_cols(bx_i + bh_i),
         pad_cols(bx_n), pad_cols(bh_n)], axis=1)        # (1, 4*Hp)

    # ---- Pack activations: [x | h], zero padded to aligned shapes ----
    xh = jnp.concatenate([x.astype(f32), hidden.astype(f32)], axis=1)
    xh = jnp.pad(xh, ((0, Bp - B), (0, Kp - K)))         # (Bp, Kp)
    h_pad = jnp.pad(hidden.astype(f32), ((0, Bp - B), (0, Hp - H)))  # (Bp, Hp)

    grid = (Bp // TB,)
    out = pl.pallas_call(
        _gru_cell_kernel,
        out_shape=jax.ShapeDtypeStruct((Bp, Hp), x.dtype),
        grid=grid,
        in_specs=[
            pl.BlockSpec((TB, Kp), lambda i: (i, 0)),      # [x|h]: streamed
            pl.BlockSpec((TB, Hp), lambda i: (i, 0)),      # h:     streamed
            pl.BlockSpec((Kp, 4 * Hp), lambda i: (0, 0)),  # W:     resident
            pl.BlockSpec((1, 4 * Hp), lambda i: (0, 0)),   # bias:  resident
        ],
        out_specs=pl.BlockSpec((TB, Hp), lambda i: (i, 0)),
        compiler_params=pltpu.CompilerParams(
            dimension_semantics=("parallel",)),
    )(xh, h_pad, w, b)

    return out[:B, :H]


def _reference_gru(x, hidden, wx_t, bx, wh_t, bh):
    gate_x = x @ wx_t + bx
    gate_h = hidden @ wh_t + bh
    H = hidden.shape[-1]
    i_r, i_i, i_n = gate_x[:, :H], gate_x[:, H:2 * H], gate_x[:, 2 * H:]
    h_r, h_i, h_n = gate_h[:, :H], gate_h[:, H:2 * H], gate_h[:, 2 * H:]
    resetgate = jax.nn.sigmoid(i_r + h_r)
    inputgate = jax.nn.sigmoid(i_i + h_i)
    newgate = jnp.tanh(i_n + resetgate * h_n)
    return newgate + inputgate * (hidden - newgate)


if __name__ == "__main__":
    # Keep the fused in-kernel matmul and the XLA reference numerically
    # comparable (full f32 passes on the MXU for both).
    jax.config.update("jax_default_matmul_precision", "highest")

    def run_case(batch, input_size, hidden_size, block_b):
        key = jax.random.PRNGKey(0)
        kx, kh, kwx, kbx, kwh, kbh = jax.random.split(key, 6)

        # Deterministic init matching reset_parameters():
        # uniform(-1/sqrt(hidden_size), 1/sqrt(hidden_size)).
        std = 1.0 / math.sqrt(hidden_size)
        # PyTorch Linear weight is (out, in); we store the transposed (in, out).
        wx_t = jax.random.uniform(kwx, (input_size, 3 * hidden_size),
                                  minval=-std, maxval=std, dtype=jnp.float32)
        bx = jax.random.uniform(kbx, (1, 3 * hidden_size),
                                minval=-std, maxval=std, dtype=jnp.float32)
        wh_t = jax.random.uniform(kwh, (hidden_size, 3 * hidden_size),
                                  minval=-std, maxval=std, dtype=jnp.float32)
        bh = jax.random.uniform(kbh, (1, 3 * hidden_size),
                                minval=-std, maxval=std, dtype=jnp.float32)

        x = jax.random.normal(kx, (batch, input_size), dtype=jnp.float32)
        hidden = jax.random.normal(kh, (batch, hidden_size), dtype=jnp.float32)

        out = jax.block_until_ready(
            gru_cell(x, hidden, wx_t, bx, wh_t, bh, block_b=block_b))
        ref = _reference_gru(x, hidden, wx_t, bx, wh_t, bh)

        assert out.shape == (batch, hidden_size)
        max_diff = jnp.max(jnp.abs(out - ref))
        assert jnp.allclose(out, ref, atol=1e-5, rtol=1e-5), (
            f"mismatch (B={batch}, I={input_size}, H={hidden_size}): "
            f"max abs diff = {max_diff}")

    # Base case from the module spec (single block, grid=(1,)).
    run_case(batch=2, input_size=16, hidden_size=32, block_b=256)
    # Exercise batch grid (>1 step), batch/K/H padding paths.
    run_case(batch=20, input_size=21, hidden_size=160, block_b=8)

    print("KERNEL_OK")
</pallas_src>

<mosaic_0001>
module attributes {stable_mosaic.version = 11 : i64} {
  func.func @_gru_cell_kernel(%arg0: i32, %arg1: memref<8x48xf32, #tpu.memory_space<vmem>>, %arg2: memref<8x128xf32, #tpu.memory_space<vmem>>, %arg3: memref<48x512xf32, #tpu.memory_space<vmem>>, %arg4: memref<1x512xf32, #tpu.memory_space<vmem>>, %arg5: memref<8x128xf32, #tpu.memory_space<vmem>>) attributes {dimension_semantics = [#tpu.dimension_semantics<parallel>], iteration_bounds = array<i64: 1>, scalar_prefetch = 0 : i64, scratch_operands = 0 : i64, tpu.core_type = #tpu.core_type<tc>, window_params = [{transform_indices = @transform_0, window_bounds = array<i64: 8, 48>}, {transform_indices = @transform_1, window_bounds = array<i64: 8, 128>}, {pipeline_mode = #tpu.pipeline_mode<synchronous>, transform_indices = @transform_2, window_bounds = array<i64: 48, 512>}, {pipeline_mode = #tpu.pipeline_mode<synchronous>, transform_indices = @transform_3, window_bounds = array<i64: 1, 512>}, {transform_indices = @transform_4, window_bounds = array<i64: 8, 128>}]} {
    %c0 = arith.constant 0 : index
    %c0_0 = arith.constant 0 : index
    %0 = vector.load %arg1[%c0, %c0_0] : memref<8x48xf32, #tpu.memory_space<vmem>>, vector<8x48xf32>
    %c0_1 = arith.constant 0 : index
    %c0_2 = arith.constant 0 : index
    %1 = vector.load %arg3[%c0_1, %c0_2] : memref<48x512xf32, #tpu.memory_space<vmem>>, vector<48x512xf32>
    %cst = arith.constant dense<0.000000e+00> : vector<8x512xf32>
    %2 = tpu.matmul %0, %1, %cst {dimension_numbers = #tpu.dot_dimension_numbers<[1], [0], [0], [1], [0, 0, 1, 1], [], []>, precision = #tpu.contract_precision<fp32>} : vector<8x48xf32>, vector<48x512xf32>, vector<8x512xf32> -> vector<8x512xf32>
    %c0_3 = arith.constant 0 : index
    %c0_4 = arith.constant 0 : index
    %3 = vector.load %arg4[%c0_3, %c0_4] : memref<1x512xf32, #tpu.memory_space<vmem>>, vector<1x512xf32>
    %4 = vector.broadcast %3 : vector<1x512xf32> to vector<8x512xf32>
    %5 = arith.addf %2, %4 : vector<8x512xf32>
    %6 = vector.extract_strided_slice %5 {offsets = [0, 0], sizes = [8, 128], strides = [1, 1]} : vector<8x512xf32> to vector<8x128xf32>
    %7 = vector.extract_strided_slice %5 {offsets = [0, 128], sizes = [8, 128], strides = [1, 1]} : vector<8x512xf32> to vector<8x128xf32>
    %8 = vector.extract_strided_slice %5 {offsets = [0, 256], sizes = [8, 128], strides = [1, 1]} : vector<8x512xf32> to vector<8x128xf32>
    %9 = vector.extract_strided_slice %5 {offsets = [0, 384], sizes = [8, 128], strides = [1, 1]} : vector<8x512xf32> to vector<8x128xf32>
    %10 = arith.negf %6 : vector<8x128xf32>
    %11 = math.exp %10 : vector<8x128xf32>
    %cst_5 = arith.constant 1.000000e+00 : f32
    %12 = vector.broadcast %cst_5 : f32 to vector<8x128xf32>
    %13 = arith.addf %12, %11 : vector<8x128xf32>
    %14 = arith.divf %12, %13 : vector<8x128xf32>
    %15 = arith.negf %7 : vector<8x128xf32>
    %16 = math.exp %15 : vector<8x128xf32>
    %cst_6 = arith.constant 1.000000e+00 : f32
    %17 = vector.broadcast %cst_6 : f32 to vector<8x128xf32>
    %18 = arith.addf %17, %16 : vector<8x128xf32>
    %19 = arith.divf %17, %18 : vector<8x128xf32>
    %20 = arith.mulf %14, %9 : vector<8x128xf32>
    %21 = arith.addf %8, %20 : vector<8x128xf32>
    %22 = math.tanh %21 : vector<8x128xf32>
    %c0_7 = arith.constant 0 : index
    %c0_8 = arith.constant 0 : index
    %23 = vector.load %arg2[%c0_7, %c0_8] : memref<8x128xf32, #tpu.memory_space<vmem>>, vector<8x128xf32>
    %24 = arith.subf %23, %22 : vector<8x128xf32>
    %25 = arith.mulf %19, %24 : vector<8x128xf32>
    %26 = arith.addf %22, %25 : vector<8x128xf32>
    %c0_9 = arith.constant 0 : index
    %c0_10 = arith.constant 0 : index
    %27 = vector.load %arg5[%c0_9, %c0_10] : memref<8x128xf32, #tpu.memory_space<vmem>>, vector<8x128xf32>
    tpu.vector_store %arg5[%c0_9, %c0_10], %26 {strides = array<i32>} : memref<8x128xf32, #tpu.memory_space<vmem>>, vector<8x128xf32>,
    return
  }
  func.func @transform_0(%arg0: i32) -> (i32, i32) {
    %c0_i32 = arith.constant 0 : i32
    %c0_i32_0 = arith.constant 0 : i32
    return %arg0, %c0_i32 : i32, i32
  }
  func.func @transform_1(%arg0: i32) -> (i32, i32) {
    %c0_i32 = arith.constant 0 : i32
    %c0_i32_0 = arith.constant 0 : i32
    return %arg0, %c0_i32 : i32, i32
  }
  func.func @transform_2(%arg0: i32) -> (i32, i32) {
    %c0_i32 = arith.constant 0 : i32
    %c0_i32_0 = arith.constant 0 : i32
    %c0_i32_1 = arith.constant 0 : i32
    return %c0_i32, %c0_i32_0 : i32, i32
  }
  func.func @transform_3(%arg0: i32) -> (i32, i32) {
    %c0_i32 = arith.constant 0 : i32
    %c0_i32_0 = arith.constant 0 : i32
    %c0_i32_1 = arith.constant 0 : i32
    return %c0_i32, %c0_i32_0 : i32, i32
  }
  func.func @transform_4(%arg0: i32) -> (i32, i32) {
    %c0_i32 = arith.constant 0 : i32
    %c0_i32_0 = arith.constant 0 : i32
    return %arg0, %c0_i32 : i32, i32
  }
}

</mosaic_0001>

<llo_original>
// kernel: tpu_custom_call.1
$region0: #{tpu_custom_call.1}
  #allocation0 [shape = 'u32[]', space=smem, size = 0x4, offset = 0x4, fixed_abs, tag = 'smem constant byte address 0x4 - core index']
  #allocation1 [shape = 'u32[144,128]{1,0:T(1,128)}', space=vmem, size = 0x12000, scoped, tag = 'internal scratch']
  %s0 = inlined_call_operand.hbm [shape: f32[8,48], index: 0, kind: input, shape index: {}]
  %s1 = inlined_call_operand.hbm [shape: f32[8,128], index: 1, kind: input, shape index: {}]
  %s2 = inlined_call_operand.hbm [shape: f32[48,512], index: 2, kind: input, shape index: {}]
  %s3 = inlined_call_operand.vmem [shape: f32[1,512], index: 3, kind: input, shape index: {}]
  %s4 = inlined_call_operand.hbm [shape: f32[8,128], index: 4, kind: output, shape index: {}]
  %s5 = sld [smem:[#allocation0]]
  $region38: #{tpu_custom_call.1} parent=0
    _
  %s7 = ssub.s32 1, %s5
  %s8 = scalar_select 0, %s7, %s5
  $region1: #{tpu_custom_call.1} parent=0
    #allocation2 [shape = 'u8[4096]{0}', space=vmem, size = 0x1000, scoped, tag = 'input window, operand 0, single buffered']
    #allocation3 [shape = 's32[1]{0}', space=sflag, size = 0x4, scoped, tag = 'scoped memory for tpu_custom_call.1']
    #allocation4 [shape = 's32[1]{0}', space=sflag, size = 0x4, scoped, tag = 'scoped memory for tpu_custom_call.1']
    #allocation5 [shape = 'u8[4096]{0}', space=vmem, size = 0x1000, scoped, tag = 'input window, operand 1, single buffered']
    #allocation6 [shape = 's32[1]{0}', space=sflag, size = 0x4, scoped, tag = 'scoped memory for tpu_custom_call.1']
    #allocation7 [shape = 'u8[98304]{0}', space=vmem, size = 0x18000, scoped, tag = 'input window, operand 2, single buffered']
    #allocation8 [shape = 'u8[4096]{0}', space=vmem, size = 0x1000, scoped, tag = 'output window, operand 0, single buffered']
    %9 = vsyncpa [#allocation3], 0
    %10 = vsyncpa [#allocation6], 0
    %11 = vsyncpa [#allocation4], 0
    // Predicated region
    $region2: #{tpu_custom_call.1} parent=1 // pred_check
      _
    $region3: #{tpu_custom_call.1} parent=1 // pred_check_branch
      %13 = sbr.rel (0) target = $region5
    $region4: #{tpu_custom_call.1} parent=1 // pred_region
      %s15 = ssub.s32 128, 128
      %16 = vsyncadd [#allocation3], %s15
      %s18 = sshll.u32 [#allocation2], 4
      %s19 = int_to_ptr.vmem [resolvable:$true] %s18
      %21 = dma.hbm_to_vmem [thread:$0]  %s0, 128, %s19, [#allocation3]
    $region5: #{tpu_custom_call.1} parent=1 // pred_fallthru
      _
    // Predicated region
    $region6: #{tpu_custom_call.1} parent=1 // pred_check
      _
    $region7: #{tpu_custom_call.1} parent=1 // pred_check_branch
      %23 = sbr.rel (0) target = $region9
    $region8: #{tpu_custom_call.1} parent=1 // pred_region
      %s25 = ssub.s32 128, 128
      %26 = vsyncadd [#allocation6], %s25
      %s28 = sshll.u32 [#allocation5], 4
      %s29 = int_to_ptr.vmem [resolvable:$true] %s28
      %31 = dma.hbm_to_vmem [thread:$0]  %s1, 128, %s29, [#allocation6]
    $region9: #{tpu_custom_call.1} parent=1 // pred_fallthru
      _
    // Predicated region
    $region10: #{tpu_custom_call.1} parent=1 // pred_check
      _
    $region11: #{tpu_custom_call.1} parent=1 // pred_check_branch
      %33 = sbr.rel (0) target = $region13
    $region12: #{tpu_custom_call.1} parent=1 // pred_region
      %s35 = ssub.s32 3072, 3072
      %36 = vsyncadd [#allocation6], %s35
      %s37 = sshll.u32 [#allocation7], 4
      %s38 = int_to_ptr.vmem [resolvable:$true] %s37
      %43 = dma.hbm_to_vmem [thread:$0]  %s2, 3072, %s38, [#allocation6], 512, 512, 32
    $region13: #{tpu_custom_call.1} parent=1 // pred_fallthru
      _
    // Predicated region
    $region14: #{tpu_custom_call.1} parent=1 // pred_check
      _
    $region15: #{tpu_custom_call.1} parent=1 // pred_check_branch
      %45 = sbr.rel (0) target = $region17
    $region16: #{tpu_custom_call.1} parent=1 // pred_region
      _
    $region17: #{tpu_custom_call.1} parent=1 // pred_fallthru
      _
    // Predicated region
    $region18: #{tpu_custom_call.1} parent=1 // pred_check
      _
    $region19: #{tpu_custom_call.1} parent=1 // pred_check_branch
      %47 = sbr.rel (0) target = $region21
    $region20: #{tpu_custom_call.1} parent=1 // pred_region
      %48 = dma.done [#allocation3], 128
    $region21: #{tpu_custom_call.1} parent=1 // pred_fallthru
      _
    // Predicated region
    $region22: #{tpu_custom_call.1} parent=1 // pred_check
      _
    $region23: #{tpu_custom_call.1} parent=1 // pred_check_branch
      %50 = sbr.rel (0) target = $region25
    $region24: #{tpu_custom_call.1} parent=1 // pred_region
      %51 = dma.done [#allocation6], 128
    $region25: #{tpu_custom_call.1} parent=1 // pred_fallthru
      _
    // Predicated region
    $region26: #{tpu_custom_call.1} parent=1 // pred_check
      _
    $region27: #{tpu_custom_call.1} parent=1 // pred_check_branch
      %53 = sbr.rel (0) target = $region29
    $region28: #{tpu_custom_call.1} parent=1 // pred_region
      %54 = dma.done [#allocation6], 3072
    $region29: #{tpu_custom_call.1} parent=1 // pred_fallthru
      _
    %v55 = vld [vmem:[#allocation2] sm:$0xff]
    %v56 = vld [vmem:[#allocation7] sm:$0xff]
    %v57 = vld [vmem:[#allocation7 + $0x8] sm:$0xff]
    %v58 = vld [vmem:[#allocation7 + $0x10] sm:$0xff]
    %v59 = vld [vmem:[#allocation7 + $0x18] sm:$0xff]
    %v60 = vld [vmem:[#allocation7 + $0x20] sm:$0xff]
    %v61 = vld [vmem:[#allocation7 + $0x28] sm:$0xff]
    %v62 = vld [vmem:[#allocation7 + $0x30] sm:$0xff]
    %v63 = vld [vmem:[#allocation7 + $0x38] sm:$0xff]
    %v64 = vld [vmem:[#allocation7 + $0x40] sm:$0xff]
    %v65 = vld [vmem:[#allocation7 + $0x48] sm:$0xff]
    %v66 = vld [vmem:[#allocation7 + $0x50] sm:$0xff]
    %v67 = vld [vmem:[#allocation7 + $0x58] sm:$0xff]
    %v68 = vld [vmem:[#allocation7 + $0x60] sm:$0xff]
    %v69 = vld [vmem:[#allocation7 + $0x68] sm:$0xff]
    %v70 = vld [vmem:[#allocation7 + $0x70] sm:$0xff]
    %v71 = vld [vmem:[#allocation7 + $0x78] sm:$0xff]
    %v72 = vld [vmem:[#allocation7 + $0x80] sm:$0xff]
    %v73 = vld [vmem:[#allocation7 + $0x88] sm:$0xff]
    %v74 = vld [vmem:[#allocation7 + $0x90] sm:$0xff]
    %v75 = vld [vmem:[#allocation7 + $0x98] sm:$0xff]
    %v76 = vld [vmem:[#allocation7 + $0xa0] sm:$0xff]
    %v77 = vld [vmem:[#allocation7 + $0xa8] sm:$0xff]
    %v78 = vld [vmem:[#allocation7 + $0xb0] sm:$0xff]
    %v79 = vld [vmem:[#allocation7 + $0xb8] sm:$0xff]
    %v80 = vld [vmem:[%s3] sm:$0xf]
    %v82 = vlaneseq
    %v83 = vshrl.u32 %v82, 7
    %v84 = vsub.s32 0, %v83
    %v85 = vrot.slane %v80, %v84
    %v86 = vlaneseq
    %v87 = vshrl.u32 %v86, 7
    %v88 = vsub.s32 1, %v87
    %v89 = vrot.slane %v80, %v88
    %v90 = vlaneseq
    %v91 = vshrl.u32 %v90, 7
    %v92 = vsub.s32 2, %v91
    %v93 = vrot.slane %v80, %v92
    %v94 = vlaneseq
    %v95 = vshrl.u32 %v94, 7
    %v96 = vsub.s32 3, %v95
    %v97 = vrot.slane %v80, %v96
    %vm102 = vcmask 392192
    %v104 = vsel %vm102, %v55, 0
    %106 = vmatprep.subr.mxu0 0.0
    %107 = vmatpush1.msra.mxu0 0.0
    %108 = vmatprep.subr.mxu0 0.0
    %109 = vmatpush1.msra.mxu0 0.0
    %110 = vmatprep.subr.mxu0 0.0
    %111 = vmatpush1.msra.mxu0 0.0
    %112 = vmatprep.subr.mxu0 0.0
    %113 = vmatpush1.msra.mxu0 0.0
    %114 = vmatprep.subr.mxu0 0.0
    %115 = vmatpush1.msra.mxu0 0.0
    %116 = vmatprep.subr.mxu0 0.0
    %117 = vmatpush1.msra.mxu0 0.0
    %118 = vmatprep.subr.mxu0 0.0
    %119 = vmatpush1.msra.mxu0 0.0
    %120 = vmatprep.subr.mxu0 0.0
    %121 = vmatpush1.msra.mxu0 0.0
    %122 = vmatprep.subr.mxu0 0.0
    %123 = vmatpush1.msra.mxu0 0.0
    %124 = vmatprep.subr.mxu0 0.0
    %125 = vmatpush1.msra.mxu0 0.0
    %v126 = vand.u32 %v77, 4294901760
    %127 = vmatprep.subr.mxu0 %v126
    %v128 = vand.u32 %v76, 4294901760
    %129 = vmatpush1.msra.mxu0 %v128
    %v130 = vand.u32 %v73, 4294901760
    %131 = vmatprep.subr.mxu0 %v130
    %v132 = vand.u32 %v72, 4294901760
    %133 = vmatpush1.msra.mxu0 %v132
    %v134 = vand.u32 %v69, 4294901760
    %135 = vmatprep.subr.mxu0 %v134
    %v136 = vand.u32 %v68, 4294901760
    %137 = vmatpush1.msra.mxu0 %v136
    %v138 = vand.u32 %v65, 4294901760
    %139 = vmatprep.subr.mxu0 %v138
    %v140 = vand.u32 %v64, 4294901760
    %141 = vmatpush1.msra.mxu0 %v140
    %v142 = vand.u32 %v61, 4294901760
    %143 = vmatprep.subr.mxu0 %v142
    %v144 = vand.u32 %v60, 4294901760
    %145 = vmatpush1.msra.mxu0 %v144
    %v146 = vand.u32 %v57, 4294901760
    %147 = vmatprep.subr.mxu0 %v146
    %v148 = vand.u32 %v56, 4294901760
    %149 = vmatpush1.msra.mxu0 %v148
    %150 = vmatprep.subr.mxu0 0.0
    %151 = vmatpush2.msra.mxu0 0.0
    %152 = vmatprep.subr.mxu0 0.0
    %153 = vmatpush2.msra.mxu0 0.0
    %154 = vmatprep.subr.mxu0 0.0
    %155 = vmatpush2.msra.mxu0 0.0
    %156 = vmatprep.subr.mxu0 0.0
    %157 = vmatpush2.msra.mxu0 0.0
    %158 = vmatprep.subr.mxu0 0.0
    %159 = vmatpush2.msra.mxu0 0.0
    %160 = vmatprep.subr.mxu0 0.0
    %161 = vmatpush2.msra.mxu0 0.0
    %162 = vmatprep.subr.mxu0 0.0
    %163 = vmatpush2.msra.mxu0 0.0
    %164 = vmatprep.subr.mxu0 0.0
    %165 = vmatpush2.msra.mxu0 0.0
    %166 = vmatprep.subr.mxu0 0.0
    %167 = vmatpush2.msra.mxu0 0.0
    %168 = vmatprep.subr.mxu0 0.0
    %169 = vmatpush2.msra.mxu0 0.0
    %170 = vmatprep.subr.mxu0 0.0
    %171 = vmatpush2.msra.mxu0 0.0
    %172 = vmatprep.subr.mxu0 0.0
    %173 = vmatpush2.msra.mxu0 0.0
    %174 = vmatprep.subr.mxu0 0.0
    %175 = vmatpush2.msra.mxu0 0.0
    %176 = vmatprep.subr.mxu0 0.0
    %177 = vmatpush2.msra.mxu0 0.0
    %178 = vmatprep.subr.mxu0 0.0
    %179 = vmatpush2.msra.mxu0 0.0
    %180 = vmatprep.subr.mxu0 0.0
    %181 = vmatpush2.msra.mxu0 0.0
    %182 = vmatprep.mubr.f32.mxu0 0.0
    %v183 = vand.u32 %v104, 4294901760
    %v184 = vsub.f32 %v104, %v183
    %v185 = vand.u32 %v184, 4294901760
    %v186 = vsub.f32 %v184, %v185
    %v187 = vand.u32 %v186, 4294901760
    %188 = vmatmul.mubr.f32.gmra.mxu0 %v187
    %v189 = vpop.f32.mrf.mxu0
    %v190 = vadd.f32 %v85, %v189
    %v191 = vpop.f32.mrf.mxu0
    %v192 = vadd.f32 %v89, %v191
    %193 = vdwg.mxu0
    %194 = vmatprep.subr.mxu0 0.0
    %195 = vmatpush1.msra.mxu0 0.0
    %196 = vmatprep.subr.mxu0 0.0
    %197 = vmatpush1.msra.mxu0 0.0
    %198 = vmatprep.subr.mxu0 0.0
    %199 = vmatpush1.msra.mxu0 0.0
    %200 = vmatprep.subr.mxu0 0.0
    %201 = vmatpush1.msra.mxu0 0.0
    %202 = vmatprep.subr.mxu0 0.0
    %203 = vmatpush1.msra.mxu0 0.0
    %204 = vmatprep.subr.mxu0 0.0
    %205 = vmatpush1.msra.mxu0 0.0
    %206 = vmatprep.subr.mxu0 0.0
    %207 = vmatpush1.msra.mxu0 0.0
    %208 = vmatprep.subr.mxu0 0.0
    %209 = vmatpush1.msra.mxu0 0.0
    %210 = vmatprep.subr.mxu0 0.0
    %211 = vmatpush1.msra.mxu0 0.0
    %212 = vmatprep.subr.mxu0 0.0
    %213 = vmatpush1.msra.mxu0 0.0
    %v214 = vand.u32 %v77, 4294901760
    %v215 = vsub.f32 %v77, %v214
    %v216 = vand.u32 %v215, 4294901760
    %v217 = vsub.f32 %v215, %v216
    %v218 = vand.u32 %v217, 4294901760
    %219 = vmatprep.subr.mxu0 %v218
    %v220 = vand.u32 %v76, 4294901760
    %v221 = vsub.f32 %v76, %v220
    %v222 = vand.u32 %v221, 4294901760
    %v223 = vsub.f32 %v221, %v222
    %v224 = vand.u32 %v223, 4294901760
    %225 = vmatpush1.msra.mxu0 %v224
    %v226 = vand.u32 %v73, 4294901760
    %v227 = vsub.f32 %v73, %v226
    %v228 = vand.u32 %v227, 4294901760
    %v229 = vsub.f32 %v227, %v228
    %v230 = vand.u32 %v229, 4294901760
    %231 = vmatprep.subr.mxu0 %v230
    %v232 = vand.u32 %v72, 4294901760
    %v233 = vsub.f32 %v72, %v232
    %v234 = vand.u32 %v233, 4294901760
    %v235 = vsub.f32 %v233, %v234
    %v236 = vand.u32 %v235, 4294901760
    %237 = vmatpush1.msra.mxu0 %v236
    %v238 = vand.u32 %v69, 4294901760
    %v239 = vsub.f32 %v69, %v238
    %v240 = vand.u32 %v239, 4294901760
    %v241 = vsub.f32 %v239, %v240
    %v242 = vand.u32 %v241, 4294901760
    %243 = vmatprep.subr.mxu0 %v242
    %v244 = vand.u32 %v68, 4294901760
    %v245 = vsub.f32 %v68, %v244
    %v246 = vand.u32 %v245, 4294901760
    %v247 = vsub.f32 %v245, %v246
    %v248 = vand.u32 %v247, 4294901760
    %249 = vmatpush1.msra.mxu0 %v248
    %v250 = vand.u32 %v65, 4294901760
    %v251 = vsub.f32 %v65, %v250
    %v252 = vand.u32 %v251, 4294901760
    %v253 = vsub.f32 %v251, %v252
    %v254 = vand.u32 %v253, 4294901760
    %255 = vmatprep.subr.mxu0 %v254
    %v256 = vand.u32 %v64, 4294901760
    %v257 = vsub.f32 %v64, %v256
    %v258 = vand.u32 %v257, 4294901760
    %v259 = vsub.f32 %v257, %v258
    %v260 = vand.u32 %v259, 4294901760
    %261 = vmatpush1.msra.mxu0 %v260
    %v262 = vand.u32 %v61, 4294901760
    %v263 = vsub.f32 %v61, %v262
    %v264 = vand.u32 %v263, 4294901760
    %v265 = vsub.f32 %v263, %v264
    %v266 = vand.u32 %v265, 4294901760
    %267 = vmatprep.subr.mxu0 %v266
    %v268 = vand.u32 %v60, 4294901760
    %v269 = vsub.f32 %v60, %v268
    %v270 = vand.u32 %v269, 4294901760
    %v271 = vsub.f32 %v269, %v270
    %v272 = vand.u32 %v271, 4294901760
    %273 = vmatpush1.msra.mxu0 %v272
    %v274 = vand.u32 %v57, 4294901760
    %v275 = vsub.f32 %v57, %v274
    %v276 = vand.u32 %v275, 4294901760
    %v277 = vsub.f32 %v275, %v276
    %v278 = vand.u32 %v277, 4294901760
    %279 = vmatprep.subr.mxu0 %v278
    %v280 = vand.u32 %v56, 4294901760
    %v281 = vsub.f32 %v56, %v280
    %v282 = vand.u32 %v281, 4294901760
    %v283 = vsub.f32 %v281, %v282
    %v284 = vand.u32 %v283, 4294901760
    %285 = vmatpush1.msra.mxu0 %v284
    %286 = vmatprep.subr.mxu0 0.0
    %287 = vmatpush2.msra.mxu0 0.0
    %288 = vmatprep.subr.mxu0 0.0
    %289 = vmatpush2.msra.mxu0 0.0
    %290 = vmatprep.subr.mxu0 0.0
    %291 = vmatpush2.msra.mxu0 0.0
    %292 = vmatprep.subr.mxu0 0.0
    %293 = vmatpush2.msra.mxu0 0.0
    %294 = vmatprep.subr.mxu0 0.0
    %295 = vmatpush2.msra.mxu0 0.0
    %296 = vmatprep.subr.mxu0 0.0
    %297 = vmatpush2.msra.mxu0 0.0
    %298 = vmatprep.subr.mxu0 0.0
    %299 = vmatpush2.msra.mxu0 0.0
    %300 = vmatprep.subr.mxu0 0.0
    %301 = vmatpush2.msra.mxu0 0.0
    %302 = vmatprep.subr.mxu0 0.0
    %303 = vmatpush2.msra.mxu0 0.0
    %304 = vmatprep.subr.mxu0 0.0
    %305 = vmatpush2.msra.mxu0 0.0
    %306 = vmatprep.subr.mxu0 0.0
    %307 = vmatpush2.msra.mxu0 0.0
    %308 = vmatprep.subr.mxu0 0.0
    %309 = vmatpush2.msra.mxu0 0.0
    %310 = vmatprep.subr.mxu0 0.0
    %311 = vmatpush2.msra.mxu0 0.0
    %312 = vmatprep.subr.mxu0 0.0
    %313 = vmatpush2.msra.mxu0 0.0
    %314 = vmatprep.subr.mxu0 0.0
    %315 = vmatpush2.msra.mxu0 0.0
    %316 = vmatprep.subr.mxu0 0.0
    %317 = vmatpush2.msra.mxu0 0.0
    %318 = vmatprep.mubr.f32.mxu0 0.0
    %v319 = vand.u32 %v104, 4294901760
    %320 = vmatmul.mubr.f32.gmra.mxu0 %v319
    %v321 = vpop.f32.mrf.mxu0
    %v322 = vadd.f32 %v190, %v321
    %v323 = vpop.f32.mrf.mxu0
    %v324 = vadd.f32 %v192, %v323
    %325 = vdwg.mxu0
    %326 = vmatprep.subr.mxu0 0.0
    %327 = vmatpush1.msra.mxu0 0.0
    %328 = vmatprep.subr.mxu0 0.0
    %329 = vmatpush1.msra.mxu0 0.0
    %330 = vmatprep.subr.mxu0 0.0
    %331 = vmatpush1.msra.mxu0 0.0
    %332 = vmatprep.subr.mxu0 0.0
    %333 = vmatpush1.msra.mxu0 0.0
    %334 = vmatprep.subr.mxu0 0.0
    %335 = vmatpush1.msra.mxu0 0.0
    %336 = vmatprep.subr.mxu0 0.0
    %337 = vmatpush1.msra.mxu0 0.0
    %338 = vmatprep.subr.mxu0 0.0
    %339 = vmatpush1.msra.mxu0 0.0
    %340 = vmatprep.subr.mxu0 0.0
    %341 = vmatpush1.msra.mxu0 0.0
    %342 = vmatprep.subr.mxu0 0.0
    %343 = vmatpush1.msra.mxu0 0.0
    %344 = vmatprep.subr.mxu0 0.0
    %345 = vmatpush1.msra.mxu0 0.0
    %v346 = vand.u32 %v77, 4294901760
    %v347 = vsub.f32 %v77, %v346
    %348 = vmatprep.subr.mxu0 %v347
    %v349 = vand.u32 %v76, 4294901760
    %v350 = vsub.f32 %v76, %v349
    %351 = vmatpush1.msra.mxu0 %v350
    %v352 = vand.u32 %v73, 4294901760
    %v353 = vsub.f32 %v73, %v352
    %354 = vmatprep.subr.mxu0 %v353
    %v355 = vand.u32 %v72, 4294901760
    %v356 = vsub.f32 %v72, %v355
    %357 = vmatpush1.msra.mxu0 %v356
    %v358 = vand.u32 %v69, 4294901760
    %v359 = vsub.f32 %v69, %v358
    %360 = vmatprep.subr.mxu0 %v359
    %v361 = vand.u32 %v68, 4294901760
    %v362 = vsub.f32 %v68, %v361
    %363 = vmatpush1.msra.mxu0 %v362
    %v364 = vand.u32 %v65, 4294901760
    %v365 = vsub.f32 %v65, %v364
    %366 = vmatprep.subr.mxu0 %v365
    %v367 = vand.u32 %v64, 4294901760
    %v368 = vsub.f32 %v64, %v367
    %369 = vmatpush1.msra.mxu0 %v368
    %v370 = vand.u32 %v61, 4294901760
    %v371 = vsub.f32 %v61, %v370
    %372 = vmatprep.subr.mxu0 %v371
    %v373 = vand.u32 %v60, 4294901760
    %v374 = vsub.f32 %v60, %v373
    %375 = vmatpush1.msra.mxu0 %v374
    %v376 = vand.u32 %v57, 4294901760
    %v377 = vsub.f32 %v57, %v376
    %378 = vmatprep.subr.mxu0 %v377
    %v379 = vand.u32 %v56, 4294901760
    %v380 = vsub.f32 %v56, %v379
    %381 = vmatpush1.msra.mxu0 %v380
    %382 = vmatprep.subr.mxu0 0.0
    %383 = vmatpush2.msra.mxu0 0.0
    %384 = vmatprep.subr.mxu0 0.0
    %385 = vmatpush2.msra.mxu0 0.0
    %386 = vmatprep.subr.mxu0 0.0
    %387 = vmatpush2.msra.mxu0 0.0
    %388 = vmatprep.subr.mxu0 0.0
    %389 = vmatpush2.msra.mxu0 0.0
    %390 = vmatprep.subr.mxu0 0.0
    %391 = vmatpush2.msra.mxu0 0.0
    %392 = vmatprep.subr.mxu0 0.0
    %393 = vmatpush2.msra.mxu0 0.0
    %394 = vmatprep.subr.mxu0 0.0
    %395 = vmatpush2.msra.mxu0 0.0
    %396 = vmatprep.subr.mxu0 0.0
    %397 = vmatpush2.msra.mxu0 0.0
    %398 = vmatprep.subr.mxu0 0.0
    %399 = vmatpush2.msra.mxu0 0.0
    %400 = vmatprep.subr.mxu0 0.0
    %401 = vmatpush2.msra.mxu0 0.0
    %402 = vmatprep.subr.mxu0 0.0
    %403 = vmatpush2.msra.mxu0 0.0
    %404 = vmatprep.subr.mxu0 0.0
    %405 = vmatpush2.msra.mxu0 0.0
    %406 = vmatprep.subr.mxu0 0.0
    %407 = vmatpush2.msra.mxu0 0.0
    %408 = vmatprep.subr.mxu0 0.0
    %409 = vmatpush2.msra.mxu0 0.0
    %410 = vmatprep.subr.mxu0 0.0
    %411 = vmatpush2.msra.mxu0 0.0
    %412 = vmatprep.subr.mxu0 0.0
    %413 = vmatpush2.msra.mxu0 0.0
    %414 = vmatprep.mubr.f32.mxu0 0.0
    %v415 = vand.u32 %v104, 4294901760
    %v416 = vsub.f32 %v104, %v415
    %417 = vmatmul.mubr.f32.gmra.mxu0 %v416
    %v418 = vpop.f32.mrf.mxu0
    %v419 = vadd.f32 %v322, %v418
    %v420 = vpop.f32.mrf.mxu0
    %v421 = vadd.f32 %v324, %v420
    %422 = vdwg.mxu0
    %423 = vmatprep.subr.mxu0 0.0
    %424 = vmatpush1.msra.mxu0 0.0
    %425 = vmatprep.subr.mxu0 0.0
    %426 = vmatpush1.msra.mxu0 0.0
    %427 = vmatprep.subr.mxu0 0.0
    %428 = vmatpush1.msra.mxu0 0.0
    %429 = vmatprep.subr.mxu0 0.0
    %430 = vmatpush1.msra.mxu0 0.0
    %431 = vmatprep.subr.mxu0 0.0
    %432 = vmatpush1.msra.mxu0 0.0
    %433 = vmatprep.subr.mxu0 0.0
    %434 = vmatpush1.msra.mxu0 0.0
    %435 = vmatprep.subr.mxu0 0.0
    %436 = vmatpush1.msra.mxu0 0.0
    %437 = vmatprep.subr.mxu0 0.0
    %438 = vmatpush1.msra.mxu0 0.0
    %439 = vmatprep.subr.mxu0 0.0
    %440 = vmatpush1.msra.mxu0 0.0
    %441 = vmatprep.subr.mxu0 0.0
    %442 = vmatpush1.msra.mxu0 0.0
    %v443 = vand.u32 %v77, 4294901760
    %444 = vmatprep.subr.mxu0 %v443
    %v445 = vand.u32 %v76, 4294901760
    %446 = vmatpush1.msra.mxu0 %v445
    %v447 = vand.u32 %v73, 4294901760
    %448 = vmatprep.subr.mxu0 %v447
    %v449 = vand.u32 %v72, 4294901760
    %450 = vmatpush1.msra.mxu0 %v449
    %v451 = vand.u32 %v69, 4294901760
    %452 = vmatprep.subr.mxu0 %v451
    %v453 = vand.u32 %v68, 4294901760
    %454 = vmatpush1.msra.mxu0 %v453
    %v455 = vand.u32 %v65, 4294901760
    %456 = vmatprep.subr.mxu0 %v455
    %v457 = vand.u32 %v64, 4294901760
    %458 = vmatpush1.msra.mxu0 %v457
    %v459 = vand.u32 %v61, 4294901760
    %460 = vmatprep.subr.mxu0 %v459
    %v461 = vand.u32 %v60, 4294901760
    %462 = vmatpush1.msra.mxu0 %v461
    %v463 = vand.u32 %v57, 4294901760
    %464 = vmatprep.subr.mxu0 %v463
    %v465 = vand.u32 %v56, 4294901760
    %466 = vmatpush1.msra.mxu0 %v465
    %467 = vmatprep.subr.mxu0 0.0
    %468 = vmatpush2.msra.mxu0 0.0
    %469 = vmatprep.subr.mxu0 0.0
    %470 = vmatpush2.msra.mxu0 0.0
    %471 = vmatprep.subr.mxu0 0.0
    %472 = vmatpush2.msra.mxu0 0.0
    %473 = vmatprep.subr.mxu0 0.0
    %474 = vmatpush2.msra.mxu0 0.0
    %475 = vmatprep.subr.mxu0 0.0
    %476 = vmatpush2.msra.mxu0 0.0
    %477 = vmatprep.subr.mxu0 0.0
    %478 = vmatpush2.msra.mxu0 0.0
    %479 = vmatprep.subr.mxu0 0.0
    %480 = vmatpush2.msra.mxu0 0.0
    %481 = vmatprep.subr.mxu0 0.0
    %482 = vmatpush2.msra.mxu0 0.0
    %483 = vmatprep.subr.mxu0 0.0
    %484 = vmatpush2.msra.mxu0 0.0
    %485 = vmatprep.subr.mxu0 0.0
    %486 = vmatpush2.msra.mxu0 0.0
    %487 = vmatprep.subr.mxu0 0.0
    %488 = vmatpush2.msra.mxu0 0.0
    %489 = vmatprep.subr.mxu0 0.0
    %490 = vmatpush2.msra.mxu0 0.0
    %491 = vmatprep.subr.mxu0 0.0
    %492 = vmatpush2.msra.mxu0 0.0
    %493 = vmatprep.subr.mxu0 0.0
    %494 = vmatpush2.msra.mxu0 0.0
    %495 = vmatprep.subr.mxu0 0.0
    %496 = vmatpush2.msra.mxu0 0.0
    %497 = vmatprep.subr.mxu0 0.0
    %498 = vmatpush2.msra.mxu0 0.0
    %499 = vmatprep.mubr.f32.mxu0 0.0
    %v500 = vand.u32 %v104, 4294901760
    %v501 = vsub.f32 %v104, %v500
    %v502 = vand.u32 %v501, 4294901760
    %503 = vmatmul.mubr.f32.gmra.mxu0 %v502
    %v504 = vpop.f32.mrf.mxu0
    %v505 = vadd.f32 %v419, %v504
    %v506 = vpop.f32.mrf.mxu0
    %v507 = vadd.f32 %v421, %v506
    %508 = vdwg.mxu0
    %509 = vmatprep.subr.mxu0 0.0
    %510 = vmatpush1.msra.mxu0 0.0
    %511 = vmatprep.subr.mxu0 0.0
    %512 = vmatpush1.msra.mxu0 0.0
    %513 = vmatprep.subr.mxu0 0.0
    %514 = vmatpush1.msra.mxu0 0.0
    %515 = vmatprep.subr.mxu0 0.0
    %516 = vmatpush1.msra.mxu0 0.0
    %517 = vmatprep.subr.mxu0 0.0
    %518 = vmatpush1.msra.mxu0 0.0
    %519 = vmatprep.subr.mxu0 0.0
    %520 = vmatpush1.msra.mxu0 0.0
    %521 = vmatprep.subr.mxu0 0.0
    %522 = vmatpush1.msra.mxu0 0.0
    %523 = vmatprep.subr.mxu0 0.0
    %524 = vmatpush1.msra.mxu0 0.0
    %525 = vmatprep.subr.mxu0 0.0
    %526 = vmatpush1.msra.mxu0 0.0
    %527 = vmatprep.subr.mxu0 0.0
    %528 = vmatpush1.msra.mxu0 0.0
    %v529 = vand.u32 %v77, 4294901760
    %v530 = vsub.f32 %v77, %v529
    %v531 = vand.u32 %v530, 4294901760
    %532 = vmatprep.subr.mxu0 %v531
    %v533 = vand.u32 %v76, 4294901760
    %v534 = vsub.f32 %v76, %v533
    %v535 = vand.u32 %v534, 4294901760
    %536 = vmatpush1.msra.mxu0 %v535
    %v537 = vand.u32 %v73, 4294901760
    %v538 = vsub.f32 %v73, %v537
    %v539 = vand.u32 %v538, 4294901760
    %540 = vmatprep.subr.mxu0 %v539
    %v541 = vand.u32 %v72, 4294901760
    %v542 = vsub.f32 %v72, %v541
    %v543 = vand.u32 %v542, 4294901760
    %544 = vmatpush1.msra.mxu0 %v543
    %v545 = vand.u32 %v69, 4294901760
    %v546 = vsub.f32 %v69, %v545
    %v547 = vand.u32 %v546, 4294901760
    %548 = vmatprep.subr.mxu0 %v547
    %v549 = vand.u32 %v68, 4294901760
    %v550 = vsub.f32 %v68, %v549
    %v551 = vand.u32 %v550, 4294901760
    %552 = vmatpush1.msra.mxu0 %v551
    %v553 = vand.u32 %v65, 4294901760
    %v554 = vsub.f32 %v65, %v553
    %v555 = vand.u32 %v554, 4294901760
    %556 = vmatprep.subr.mxu0 %v555
    %v557 = vand.u32 %v64, 4294901760
    %v558 = vsub.f32 %v64, %v557
    %v559 = vand.u32 %v558, 4294901760
    %560 = vmatpush1.msra.mxu0 %v559
    %v561 = vand.u32 %v61, 4294901760
    %v562 = vsub.f32 %v61, %v561
    %v563 = vand.u32 %v562, 4294901760
    %564 = vmatprep.subr.mxu0 %v563
    %v565 = vand.u32 %v60, 4294901760
    %v566 = vsub.f32 %v60, %v565
    %v567 = vand.u32 %v566, 4294901760
    %568 = vmatpush1.msra.mxu0 %v567
    %v569 = vand.u32 %v57, 4294901760
    %v570 = vsub.f32 %v57, %v569
    %v571 = vand.u32 %v570, 4294901760
    %572 = vmatprep.subr.mxu0 %v571
    %v573 = vand.u32 %v56, 4294901760
    %v574 = vsub.f32 %v56, %v573
    %v575 = vand.u32 %v574, 4294901760
    %576 = vmatpush1.msra.mxu0 %v575
    %577 = vmatprep.subr.mxu0 0.0
    %578 = vmatpush2.msra.mxu0 0.0
    %579 = vmatprep.subr.mxu0 0.0
    %580 = vmatpush2.msra.mxu0 0.0
    %581 = vmatprep.subr.mxu0 0.0
    %582 = vmatpush2.msra.mxu0 0.0
    %583 = vmatprep.subr.mxu0 0.0
    %584 = vmatpush2.msra.mxu0 0.0
    %585 = vmatprep.subr.mxu0 0.0
    %586 = vmatpush2.msra.mxu0 0.0
    %587 = vmatprep.subr.mxu0 0.0
    %588 = vmatpush2.msra.mxu0 0.0
    %589 = vmatprep.subr.mxu0 0.0
    %590 = vmatpush2.msra.mxu0 0.0
    %591 = vmatprep.subr.mxu0 0.0
    %592 = vmatpush2.msra.mxu0 0.0
    %593 = vmatprep.subr.mxu0 0.0
    %594 = vmatpush2.msra.mxu0 0.0
    %595 = vmatprep.subr.mxu0 0.0
    %596 = vmatpush2.msra.mxu0 0.0
    %597 = vmatprep.subr.mxu0 0.0
    %598 = vmatpush2.msra.mxu0 0.0
    %599 = vmatprep.subr.mxu0 0.0
    %600 = vmatpush2.msra.mxu0 0.0
    %601 = vmatprep.subr.mxu0 0.0
    %602 = vmatpush2.msra.mxu0 0.0
    %603 = vmatprep.subr.mxu0 0.0
    %604 = vmatpush2.msra.mxu0 0.0
    %605 = vmatprep.subr.mxu0 0.0
    %606 = vmatpush2.msra.mxu0 0.0
    %607 = vmatprep.subr.mxu0 0.0
    %608 = vmatpush2.msra.mxu0 0.0
    %609 = vmatprep.mubr.f32.mxu0 0.0
    %v610 = vand.u32 %v104, 4294901760
    %611 = vmatmul.mubr.f32.gmra.mxu0 %v610
    %v612 = vpop.f32.mrf.mxu0
    %v613 = vadd.f32 %v505, %v612
    %v614 = vpop.f32.mrf.mxu0
    %v615 = vadd.f32 %v507, %v614
    %616 = vdwg.mxu0
    %617 = vmatprep.subr.mxu0 0.0
    %618 = vmatpush1.msra.mxu0 0.0
    %619 = vmatprep.subr.mxu0 0.0
    %620 = vmatpush1.msra.mxu0 0.0
    %621 = vmatprep.subr.mxu0 0.0
    %622 = vmatpush1.msra.mxu0 0.0
    %623 = vmatprep.subr.mxu0 0.0
    %624 = vmatpush1.msra.mxu0 0.0
    %625 = vmatprep.subr.mxu0 0.0
    %626 = vmatpush1.msra.mxu0 0.0
    %627 = vmatprep.subr.mxu0 0.0
    %628 = vmatpush1.msra.mxu0 0.0
    %629 = vmatprep.subr.mxu0 0.0
    %630 = vmatpush1.msra.mxu0 0.0
    %631 = vmatprep.subr.mxu0 0.0
    %632 = vmatpush1.msra.mxu0 0.0
    %633 = vmatprep.subr.mxu0 0.0
    %634 = vmatpush1.msra.mxu0 0.0
    %635 = vmatprep.subr.mxu0 0.0
    %636 = vmatpush1.msra.mxu0 0.0
    %v637 = vand.u32 %v77, 4294901760
    %638 = vmatprep.subr.mxu0 %v637
    %v639 = vand.u32 %v76, 4294901760
    %640 = vmatpush1.msra.mxu0 %v639
    %v641 = vand.u32 %v73, 4294901760
    %642 = vmatprep.subr.mxu0 %v641
    %v643 = vand.u32 %v72, 4294901760
    %644 = vmatpush1.msra.mxu0 %v643
    %v645 = vand.u32 %v69, 4294901760
    %646 = vmatprep.subr.mxu0 %v645
    %v647 = vand.u32 %v68, 4294901760
    %648 = vmatpush1.msra.mxu0 %v647
    %v649 = vand.u32 %v65, 4294901760
    %650 = vmatprep.subr.mxu0 %v649
    %v651 = vand.u32 %v64, 4294901760
    %652 = vmatpush1.msra.mxu0 %v651
    %v653 = vand.u32 %v61, 4294901760
    %654 = vmatprep.subr.mxu0 %v653
    %v655 = vand.u32 %v60, 4294901760
    %656 = vmatpush1.msra.mxu0 %v655
    %v657 = vand.u32 %v57, 4294901760
    %658 = vmatprep.subr.mxu0 %v657
    %v659 = vand.u32 %v56, 4294901760
    %660 = vmatpush1.msra.mxu0 %v659
    %661 = vmatprep.subr.mxu0 0.0
    %662 = vmatpush2.msra.mxu0 0.0
    %663 = vmatprep.subr.mxu0 0.0
    %664 = vmatpush2.msra.mxu0 0.0
    %665 = vmatprep.subr.mxu0 0.0
    %666 = vmatpush2.msra.mxu0 0.0
    %667 = vmatprep.subr.mxu0 0.0
    %668 = vmatpush2.msra.mxu0 0.0
    %669 = vmatprep.subr.mxu0 0.0
    %670 = vmatpush2.msra.mxu0 0.0
    %671 = vmatprep.subr.mxu0 0.0
    %672 = vmatpush2.msra.mxu0 0.0
    %673 = vmatprep.subr.mxu0 0.0
    %674 = vmatpush2.msra.mxu0 0.0
    %675 = vmatprep.subr.mxu0 0.0
    %676 = vmatpush2.msra.mxu0 0.0
    %677 = vmatprep.subr.mxu0 0.0
    %678 = vmatpush2.msra.mxu0 0.0
    %679 = vmatprep.subr.mxu0 0.0
    %680 = vmatpush2.msra.mxu0 0.0
    %681 = vmatprep.subr.mxu0 0.0
    %682 = vmatpush2.msra.mxu0 0.0
    %683 = vmatprep.subr.mxu0 0.0
    %684 = vmatpush2.msra.mxu0 0.0
    %685 = vmatprep.subr.mxu0 0.0
    %686 = vmatpush2.msra.mxu0 0.0
    %687 = vmatprep.subr.mxu0 0.0
    %688 = vmatpush2.msra.mxu0 0.0
    %689 = vmatprep.subr.mxu0 0.0
    %690 = vmatpush2.msra.mxu0 0.0
    %691 = vmatprep.subr.mxu0 0.0
    %692 = vmatpush2.msra.mxu0 0.0
    %693 = vmatprep.mubr.f32.mxu0 0.0
    %v694 = vand.u32 %v104, 4294901760
    %695 = vmatmul.mubr.f32.gmra.mxu0 %v694
    %v696 = vpop.f32.mrf.mxu0
    %v697 = vadd.f32 %v613, %v696
    %v698 = vpop.f32.mrf.mxu0
    %v699 = vadd.f32 %v615, %v698
    %700 = vdwg.mxu0
    %701 = vmatprep.subr.mxu0 0.0
    %702 = vmatpush1.msra.mxu0 0.0
    %703 = vmatprep.subr.mxu0 0.0
    %704 = vmatpush1.msra.mxu0 0.0
    %705 = vmatprep.subr.mxu0 0.0
    %706 = vmatpush1.msra.mxu0 0.0
    %707 = vmatprep.subr.mxu0 0.0
    %708 = vmatpush1.msra.mxu0 0.0
    %709 = vmatprep.subr.mxu0 0.0
    %710 = vmatpush1.msra.mxu0 0.0
    %711 = vmatprep.subr.mxu0 0.0
    %712 = vmatpush1.msra.mxu0 0.0
    %713 = vmatprep.subr.mxu0 0.0
    %714 = vmatpush1.msra.mxu0 0.0
    %715 = vmatprep.subr.mxu0 0.0
    %716 = vmatpush1.msra.mxu0 0.0
    %717 = vmatprep.subr.mxu0 0.0
    %718 = vmatpush1.msra.mxu0 0.0
    %719 = vmatprep.subr.mxu0 0.0
    %720 = vmatpush1.msra.mxu0 0.0
    %v721 = vand.u32 %v79, 4294901760
    %722 = vmatprep.subr.mxu0 %v721
    %v723 = vand.u32 %v78, 4294901760
    %724 = vmatpush1.msra.mxu0 %v723
    %v725 = vand.u32 %v75, 4294901760
    %726 = vmatprep.subr.mxu0 %v725
    %v727 = vand.u32 %v74, 4294901760
    %728 = vmatpush1.msra.mxu0 %v727
    %v729 = vand.u32 %v71, 4294901760
    %730 = vmatprep.subr.mxu0 %v729
    %v731 = vand.u32 %v70, 4294901760
    %732 = vmatpush1.msra.mxu0 %v731
    %v733 = vand.u32 %v67, 4294901760
    %734 = vmatprep.subr.mxu0 %v733
    %v735 = vand.u32 %v66, 4294901760
    %736 = vmatpush1.msra.mxu0 %v735
    %v737 = vand.u32 %v63, 4294901760
    %738 = vmatprep.subr.mxu0 %v737
    %v739 = vand.u32 %v62, 4294901760
    %740 = vmatpush1.msra.mxu0 %v739
    %v741 = vand.u32 %v59, 4294901760
    %742 = vmatprep.subr.mxu0 %v741
    %v743 = vand.u32 %v58, 4294901760
    %744 = vmatpush1.msra.mxu0 %v743
    %745 = vmatprep.subr.mxu0 0.0
    %746 = vmatpush2.msra.mxu0 0.0
    %747 = vmatprep.subr.mxu0 0.0
    %748 = vmatpush2.msra.mxu0 0.0
    %749 = vmatprep.subr.mxu0 0.0
    %750 = vmatpush2.msra.mxu0 0.0
    %751 = vmatprep.subr.mxu0 0.0
    %752 = vmatpush2.msra.mxu0 0.0
    %753 = vmatprep.subr.mxu0 0.0
    %754 = vmatpush2.msra.mxu0 0.0
    %755 = vmatprep.subr.mxu0 0.0
    %756 = vmatpush2.msra.mxu0 0.0
    %757 = vmatprep.subr.mxu0 0.0
    %758 = vmatpush2.msra.mxu0 0.0
    %759 = vmatprep.subr.mxu0 0.0
    %760 = vmatpush2.msra.mxu0 0.0
    %761 = vmatprep.subr.mxu0 0.0
    %762 = vmatpush2.msra.mxu0 0.0
    %763 = vmatprep.subr.mxu0 0.0
    %764 = vmatpush2.msra.mxu0 0.0
    %765 = vmatprep.subr.mxu0 0.0
    %766 = vmatpush2.msra.mxu0 0.0
    %767 = vmatprep.subr.mxu0 0.0
    %768 = vmatpush2.msra.mxu0 0.0
    %769 = vmatprep.subr.mxu0 0.0
    %770 = vmatpush2.msra.mxu0 0.0
    %771 = vmatprep.subr.mxu0 0.0
    %772 = vmatpush2.msra.mxu0 0.0
    %773 = vmatprep.subr.mxu0 0.0
    %774 = vmatpush2.msra.mxu0 0.0
    %775 = vmatprep.subr.mxu0 0.0
    %776 = vmatpush2.msra.mxu0 0.0
    %777 = vmatprep.mubr.f32.mxu0 0.0
    %v778 = vand.u32 %v104, 4294901760
    %v779 = vsub.f32 %v104, %v778
    %v780 = vand.u32 %v779, 4294901760
    %v781 = vsub.f32 %v779, %v780
    %v782 = vand.u32 %v781, 4294901760
    %783 = vmatmul.mubr.f32.gmra.mxu0 %v782
    %v784 = vpop.f32.mrf.mxu0
    %v785 = vadd.f32 %v93, %v784
    %v786 = vpop.f32.mrf.mxu0
    %v787 = vadd.f32 %v97, %v786
    %788 = vdwg.mxu0
    %789 = vmatprep.subr.mxu0 0.0
    %790 = vmatpush1.msra.mxu0 0.0
    %791 = vmatprep.subr.mxu0 0.0
    %792 = vmatpush1.msra.mxu0 0.0
    %793 = vmatprep.subr.mxu0 0.0
    %794 = vmatpush1.msra.mxu0 0.0
    %795 = vmatprep.subr.mxu0 0.0
    %796 = vmatpush1.msra.mxu0 0.0
    %797 = vmatprep.subr.mxu0 0.0
    %798 = vmatpush1.msra.mxu0 0.0
    %799 = vmatprep.subr.mxu0 0.0
    %800 = vmatpush1.msra.mxu0 0.0
    %801 = vmatprep.subr.mxu0 0.0
    %802 = vmatpush1.msra.mxu0 0.0
    %803 = vmatprep.subr.mxu0 0.0
    %804 = vmatpush1.msra.mxu0 0.0
    %805 = vmatprep.subr.mxu0 0.0
    %806 = vmatpush1.msra.mxu0 0.0
    %807 = vmatprep.subr.mxu0 0.0
    %808 = vmatpush1.msra.mxu0 0.0
    %v809 = vand.u32 %v79, 4294901760
    %v810 = vsub.f32 %v79, %v809
    %v811 = vand.u32 %v810, 4294901760
    %v812 = vsub.f32 %v810, %v811
    %v813 = vand.u32 %v812, 4294901760
    %814 = vmatprep.subr.mxu0 %v813
    %v815 = vand.u32 %v78, 4294901760
    %v816 = vsub.f32 %v78, %v815
    %v817 = vand.u32 %v816, 4294901760
    %v818 = vsub.f32 %v816, %v817
    %v819 = vand.u32 %v818, 4294901760
    %820 = vmatpush1.msra.mxu0 %v819
    %v821 = vand.u32 %v75, 4294901760
    %v822 = vsub.f32 %v75, %v821
    %v823 = vand.u32 %v822, 4294901760
    %v824 = vsub.f32 %v822, %v823
    %v825 = vand.u32 %v824, 4294901760
    %826 = vmatprep.subr.mxu0 %v825
    %v827 = vand.u32 %v74, 4294901760
    %v828 = vsub.f32 %v74, %v827
    %v829 = vand.u32 %v828, 4294901760
    %v830 = vsub.f32 %v828, %v829
    %v831 = vand.u32 %v830, 4294901760
    %832 = vmatpush1.msra.mxu0 %v831
    %v833 = vand.u32 %v71, 4294901760
    %v834 = vsub.f32 %v71, %v833
    %v835 = vand.u32 %v834, 4294901760
    %v836 = vsub.f32 %v834, %v835
    %v837 = vand.u32 %v836, 4294901760
    %838 = vmatprep.subr.mxu0 %v837
    %v839 = vand.u32 %v70, 4294901760
    %v840 = vsub.f32 %v70, %v839
    %v841 = vand.u32 %v840, 4294901760
    %v842 = vsub.f32 %v840, %v841
    %v843 = vand.u32 %v842, 4294901760
    %844 = vmatpush1.msra.mxu0 %v843
    %v845 = vand.u32 %v67, 4294901760
    %v846 = vsub.f32 %v67, %v845
    %v847 = vand.u32 %v846, 4294901760
    %v848 = vsub.f32 %v846, %v847
    %v849 = vand.u32 %v848, 4294901760
    %850 = vmatprep.subr.mxu0 %v849
    %v851 = vand.u32 %v66, 4294901760
    %v852 = vsub.f32 %v66, %v851
    %v853 = vand.u32 %v852, 4294901760
    %v854 = vsub.f32 %v852, %v853
    %v855 = vand.u32 %v854, 4294901760
    %856 = vmatpush1.msra.mxu0 %v855
    %v857 = vand.u32 %v63, 4294901760
    %v858 = vsub.f32 %v63, %v857
    %v859 = vand.u32 %v858, 4294901760
    %v860 = vsub.f32 %v858, %v859
    %v861 = vand.u32 %v860, 4294901760
    %862 = vmatprep.subr.mxu0 %v861
    %v863 = vand.u32 %v62, 4294901760
    %v864 = vsub.f32 %v62, %v863
    %v865 = vand.u32 %v864, 4294901760
    %v866 = vsub.f32 %v864, %v865
    %v867 = vand.u32 %v866, 4294901760
    %868 = vmatpush1.msra.mxu0 %v867
    %v869 = vand.u32 %v59, 4294901760
    %v870 = vsub.f32 %v59, %v869
    %v871 = vand.u32 %v870, 4294901760
    %v872 = vsub.f32 %v870, %v871
    %v873 = vand.u32 %v872, 4294901760
    %874 = vmatprep.subr.mxu0 %v873
    %v875 = vand.u32 %v58, 4294901760
    %v876 = vsub.f32 %v58, %v875
    %v877 = vand.u32 %v876, 4294901760
    %v878 = vsub.f32 %v876, %v877
    %v879 = vand.u32 %v878, 4294901760
    %880 = vmatpush1.msra.mxu0 %v879
    %881 = vmatprep.subr.mxu0 0.0
    %882 = vmatpush2.msra.mxu0 0.0
    %883 = vmatprep.subr.mxu0 0.0
    %884 = vmatpush2.msra.mxu0 0.0
    %885 = vmatprep.subr.mxu0 0.0
    %886 = vmatpush2.msra.mxu0 0.0
    %887 = vmatprep.subr.mxu0 0.0
    %888 = vmatpush2.msra.mxu0 0.0
    %889 = vmatprep.subr.mxu0 0.0
    %890 = vmatpush2.msra.mxu0 0.0
    %891 = vmatprep.subr.mxu0 0.0
    %892 = vmatpush2.msra.mxu0 0.0
    %893 = vmatprep.subr.mxu0 0.0
    %894 = vmatpush2.msra.mxu0 0.0
    %895 = vmatprep.subr.mxu0 0.0
    %896 = vmatpush2.msra.mxu0 0.0
    %897 = vmatprep.subr.mxu0 0.0
    %898 = vmatpush2.msra.mxu0 0.0
    %899 = vmatprep.subr.mxu0 0.0
    %900 = vmatpush2.msra.mxu0 0.0
    %901 = vmatprep.subr.mxu0 0.0
    %902 = vmatpush2.msra.mxu0 0.0
    %903 = vmatprep.subr.mxu0 0.0
    %904 = vmatpush2.msra.mxu0 0.0
    %905 = vmatprep.subr.mxu0 0.0
    %906 = vmatpush2.msra.mxu0 0.0
    %907 = vmatprep.subr.mxu0 0.0
    %908 = vmatpush2.msra.mxu0 0.0
    %909 = vmatprep.subr.mxu0 0.0
    %910 = vmatpush2.msra.mxu0 0.0
    %911 = vmatprep.subr.mxu0 0.0
    %912 = vmatpush2.msra.mxu0 0.0
    %913 = vmatprep.mubr.f32.mxu0 0.0
    %v914 = vand.u32 %v104, 4294901760
    %915 = vmatmul.mubr.f32.gmra.mxu0 %v914
    %v916 = vpop.f32.mrf.mxu0
    %v917 = vadd.f32 %v785, %v916
    %v918 = vpop.f32.mrf.mxu0
    %v919 = vadd.f32 %v787, %v918
    %920 = vdwg.mxu0
    %921 = vmatprep.subr.mxu0 0.0
    %922 = vmatpush1.msra.mxu0 0.0
    %923 = vmatprep.subr.mxu0 0.0
    %924 = vmatpush1.msra.mxu0 0.0
    %925 = vmatprep.subr.mxu0 0.0
    %926 = vmatpush1.msra.mxu0 0.0
    %927 = vmatprep.subr.mxu0 0.0
    %928 = vmatpush1.msra.mxu0 0.0
    %929 = vmatprep.subr.mxu0 0.0
    %930 = vmatpush1.msra.mxu0 0.0
    %931 = vmatprep.subr.mxu0 0.0
    %932 = vmatpush1.msra.mxu0 0.0
    %933 = vmatprep.subr.mxu0 0.0
    %934 = vmatpush1.msra.mxu0 0.0
    %935 = vmatprep.subr.mxu0 0.0
    %936 = vmatpush1.msra.mxu0 0.0
    %937 = vmatprep.subr.mxu0 0.0
    %938 = vmatpush1.msra.mxu0 0.0
    %939 = vmatprep.subr.mxu0 0.0
    %940 = vmatpush1.msra.mxu0 0.0
    %v941 = vand.u32 %v79, 4294901760
    %v942 = vsub.f32 %v79, %v941
    %943 = vmatprep.subr.mxu0 %v942
    %v944 = vand.u32 %v78, 4294901760
    %v945 = vsub.f32 %v78, %v944
    %946 = vmatpush1.msra.mxu0 %v945
    %v947 = vand.u32 %v75, 4294901760
    %v948 = vsub.f32 %v75, %v947
    %949 = vmatprep.subr.mxu0 %v948
    %v950 = vand.u32 %v74, 4294901760
    %v951 = vsub.f32 %v74, %v950
    %952 = vmatpush1.msra.mxu0 %v951
    %v953 = vand.u32 %v71, 4294901760
    %v954 = vsub.f32 %v71, %v953
    %955 = vmatprep.subr.mxu0 %v954
    %v956 = vand.u32 %v70, 4294901760
    %v957 = vsub.f32 %v70, %v956
    %958 = vmatpush1.msra.mxu0 %v957
    %v959 = vand.u32 %v67, 4294901760
    %v960 = vsub.f32 %v67, %v959
    %961 = vmatprep.subr.mxu0 %v960
    %v962 = vand.u32 %v66, 4294901760
    %v963 = vsub.f32 %v66, %v962
    %964 = vmatpush1.msra.mxu0 %v963
    %v965 = vand.u32 %v63, 4294901760
    %v966 = vsub.f32 %v63, %v965
    %967 = vmatprep.subr.mxu0 %v966
    %v968 = vand.u32 %v62, 4294901760
    %v969 = vsub.f32 %v62, %v968
    %970 = vmatpush1.msra.mxu0 %v969
    %v971 = vand.u32 %v59, 4294901760
    %v972 = vsub.f32 %v59, %v971
    %973 = vmatprep.subr.mxu0 %v972
    %v974 = vand.u32 %v58, 4294901760
    %v975 = vsub.f32 %v58, %v974
    %976 = vmatpush1.msra.mxu0 %v975
    %977 = vmatprep.subr.mxu0 0.0
    %978 = vmatpush2.msra.mxu0 0.0
    %979 = vmatprep.subr.mxu0 0.0
    %980 = vmatpush2.msra.mxu0 0.0
    %981 = vmatprep.subr.mxu0 0.0
    %982 = vmatpush2.msra.mxu0 0.0
    %983 = vmatprep.subr.mxu0 0.0
    %984 = vmatpush2.msra.mxu0 0.0
    %985 = vmatprep.subr.mxu0 0.0
    %986 = vmatpush2.msra.mxu0 0.0
    %987 = vmatprep.subr.mxu0 0.0
    %988 = vmatpush2.msra.mxu0 0.0
    %989 = vmatprep.subr.mxu0 0.0
    %990 = vmatpush2.msra.mxu0 0.0
    %991 = vmatprep.subr.mxu0 0.0
    %992 = vmatpush2.msra.mxu0 0.0
    %993 = vmatprep.subr.mxu0 0.0
    %994 = vmatpush2.msra.mxu0 0.0
    %995 = vmatprep.subr.mxu0 0.0
    %996 = vmatpush2.msra.mxu0 0.0
    %997 = vmatprep.subr.mxu0 0.0
    %998 = vmatpush2.msra.mxu0 0.0
    %999 = vmatprep.subr.mxu0 0.0
    %1000 = vmatpush2.msra.mxu0 0.0
    %1001 = vmatprep.subr.mxu0 0.0
    %1002 = vmatpush2.msra.mxu0 0.0
    %1003 = vmatprep.subr.mxu0 0.0
    %1004 = vmatpush2.msra.mxu0 0.0
    %1005 = vmatprep.subr.mxu0 0.0
    %1006 = vmatpush2.msra.mxu0 0.0
    %1007 = vmatprep.subr.mxu0 0.0
    %1008 = vmatpush2.msra.mxu0 0.0
    %1009 = vmatprep.mubr.f32.mxu0 0.0
    %v1010 = vand.u32 %v104, 4294901760
    %v1011 = vsub.f32 %v104, %v1010
    %1012 = vmatmul.mubr.f32.gmra.mxu0 %v1011
    %v1013 = vpop.f32.mrf.mxu0
    %v1014 = vadd.f32 %v917, %v1013
    %v1015 = vpop.f32.mrf.mxu0
    %v1016 = vadd.f32 %v919, %v1015
    %1017 = vdwg.mxu0
    %1018 = vmatprep.subr.mxu0 0.0
    %1019 = vmatpush1.msra.mxu0 0.0
    %1020 = vmatprep.subr.mxu0 0.0
    %1021 = vmatpush1.msra.mxu0 0.0
    %1022 = vmatprep.subr.mxu0 0.0
    %1023 = vmatpush1.msra.mxu0 0.0
    %1024 = vmatprep.subr.mxu0 0.0
    %1025 = vmatpush1.msra.mxu0 0.0
    %1026 = vmatprep.subr.mxu0 0.0
    %1027 = vmatpush1.msra.mxu0 0.0
    %1028 = vmatprep.subr.mxu0 0.0
    %1029 = vmatpush1.msra.mxu0 0.0
    %1030 = vmatprep.subr.mxu0 0.0
    %1031 = vmatpush1.msra.mxu0 0.0
    %1032 = vmatprep.subr.mxu0 0.0
    %1033 = vmatpush1.msra.mxu0 0.0
    %1034 = vmatprep.subr.mxu0 0.0
    %1035 = vmatpush1.msra.mxu0 0.0
    %1036 = vmatprep.subr.mxu0 0.0
    %1037 = vmatpush1.msra.mxu0 0.0
    %v1038 = vand.u32 %v79, 4294901760
    %1039 = vmatprep.subr.mxu0 %v1038
    %v1040 = vand.u32 %v78, 4294901760
    %1041 = vmatpush1.msra.mxu0 %v1040
    %v1042 = vand.u32 %v75, 4294901760
    %1043 = vmatprep.subr.mxu0 %v1042
    %v1044 = vand.u32 %v74, 4294901760
    %1045 = vmatpush1.msra.mxu0 %v1044
    %v1046 = vand.u32 %v71, 4294901760
    %1047 = vmatprep.subr.mxu0 %v1046
    %v1048 = vand.u32 %v70, 4294901760
    %1049 = vmatpush1.msra.mxu0 %v1048
    %v1050 = vand.u32 %v67, 4294901760
    %1051 = vmatprep.subr.mxu0 %v1050
    %v1052 = vand.u32 %v66, 4294901760
    %1053 = vmatpush1.msra.mxu0 %v1052
    %v1054 = vand.u32 %v63, 4294901760
    %1055 = vmatprep.subr.mxu0 %v1054
    %v1056 = vand.u32 %v62, 4294901760
    %1057 = vmatpush1.msra.mxu0 %v1056
    %v1058 = vand.u32 %v59, 4294901760
    %1059 = vmatprep.subr.mxu0 %v1058
    %v1060 = vand.u32 %v58, 4294901760
    %1061 = vmatpush1.msra.mxu0 %v1060
    %1062 = vmatprep.subr.mxu0 0.0
    %1063 = vmatpush2.msra.mxu0 0.0
    %1064 = vmatprep.subr.mxu0 0.0
    %1065 = vmatpush2.msra.mxu0 0.0
    %1066 = vmatprep.subr.mxu0 0.0
    %1067 = vmatpush2.msra.mxu0 0.0
    %1068 = vmatprep.subr.mxu0 0.0
    %1069 = vmatpush2.msra.mxu0 0.0
    %1070 = vmatprep.subr.mxu0 0.0
    %1071 = vmatpush2.msra.mxu0 0.0
    %1072 = vmatprep.subr.mxu0 0.0
    %1073 = vmatpush2.msra.mxu0 0.0
    %1074 = vmatprep.subr.mxu0 0.0
    %1075 = vmatpush2.msra.mxu0 0.0
    %1076 = vmatprep.subr.mxu0 0.0
    %1077 = vmatpush2.msra.mxu0 0.0
    %1078 = vmatprep.subr.mxu0 0.0
    %1079 = vmatpush2.msra.mxu0 0.0
    %1080 = vmatprep.subr.mxu0 0.0
    %1081 = vmatpush2.msra.mxu0 0.0
    %1082 = vmatprep.subr.mxu0 0.0
    %1083 = vmatpush2.msra.mxu0 0.0
    %1084 = vmatprep.subr.mxu0 0.0
    %1085 = vmatpush2.msra.mxu0 0.0
    %1086 = vmatprep.subr.mxu0 0.0
    %1087 = vmatpush2.msra.mxu0 0.0
    %1088 = vmatprep.subr.mxu0 0.0
    %1089 = vmatpush2.msra.mxu0 0.0
    %1090 = vmatprep.subr.mxu0 0.0
    %1091 = vmatpush2.msra.mxu0 0.0
    %1092 = vmatprep.subr.mxu0 0.0
    %1093 = vmatpush2.msra.mxu0 0.0
    %1094 = vmatprep.mubr.f32.mxu0 0.0
    %v1095 = vand.u32 %v104, 4294901760
    %v1096 = vsub.f32 %v104, %v1095
    %v1097 = vand.u32 %v1096, 4294901760
    %1098 = vmatmul.mubr.f32.gmra.mxu0 %v1097
    %v1099 = vpop.f32.mrf.mxu0
    %v1100 = vadd.f32 %v1014, %v1099
    %v1101 = vpop.f32.mrf.mxu0
    %v1102 = vadd.f32 %v1016, %v1101
    %1103 = vdwg.mxu0
    %1104 = vmatprep.subr.mxu0 0.0
    %1105 = vmatpush1.msra.mxu0 0.0
    %1106 = vmatprep.subr.mxu0 0.0
    %1107 = vmatpush1.msra.mxu0 0.0
    %1108 = vmatprep.subr.mxu0 0.0
    %1109 = vmatpush1.msra.mxu0 0.0
    %1110 = vmatprep.subr.mxu0 0.0
    %1111 = vmatpush1.msra.mxu0 0.0
    %1112 = vmatprep.subr.mxu0 0.0
    %1113 = vmatpush1.msra.mxu0 0.0
    %1114 = vmatprep.subr.mxu0 0.0
    %1115 = vmatpush1.msra.mxu0 0.0
    %1116 = vmatprep.subr.mxu0 0.0
    %1117 = vmatpush1.msra.mxu0 0.0
    %1118 = vmatprep.subr.mxu0 0.0
    %1119 = vmatpush1.msra.mxu0 0.0
    %1120 = vmatprep.subr.mxu0 0.0
    %1121 = vmatpush1.msra.mxu0 0.0
    %1122 = vmatprep.subr.mxu0 0.0
    %1123 = vmatpush1.msra.mxu0 0.0
    %v1124 = vand.u32 %v79, 4294901760
    %v1125 = vsub.f32 %v79, %v1124
    %v1126 = vand.u32 %v1125, 4294901760
    %1127 = vmatprep.subr.mxu0 %v1126
    %v1128 = vand.u32 %v78, 4294901760
    %v1129 = vsub.f32 %v78, %v1128
    %v1130 = vand.u32 %v1129, 4294901760
    %1131 = vmatpush1.msra.mxu0 %v1130
    %v1132 = vand.u32 %v75, 4294901760
    %v1133 = vsub.f32 %v75, %v1132
    %v1134 = vand.u32 %v1133, 4294901760
    %1135 = vmatprep.subr.mxu0 %v1134
    %v1136 = vand.u32 %v74, 4294901760
    %v1137 = vsub.f32 %v74, %v1136
    %v1138 = vand.u32 %v1137, 4294901760
    %1139 = vmatpush1.msra.mxu0 %v1138
    %v1140 = vand.u32 %v71, 4294901760
    %v1141 = vsub.f32 %v71, %v1140
    %v1142 = vand.u32 %v1141, 4294901760
    %1143 = vmatprep.subr.mxu0 %v1142
    %v1144 = vand.u32 %v70, 4294901760
    %v1145 = vsub.f32 %v70, %v1144
    %v1146 = vand.u32 %v1145, 4294901760
    %1147 = vmatpush1.msra.mxu0 %v1146
    %v1148 = vand.u32 %v67, 4294901760
    %v1149 = vsub.f32 %v67, %v1148
    %v1150 = vand.u32 %v1149, 4294901760
    %1151 = vmatprep.subr.mxu0 %v1150
    %v1152 = vand.u32 %v66, 4294901760
    %v1153 = vsub.f32 %v66, %v1152
    %v1154 = vand.u32 %v1153, 4294901760
    %1155 = vmatpush1.msra.mxu0 %v1154
    %v1156 = vand.u32 %v63, 4294901760
    %v1157 = vsub.f32 %v63, %v1156
    %v1158 = vand.u32 %v1157, 4294901760
    %1159 = vmatprep.subr.mxu0 %v1158
    %v1160 = vand.u32 %v62, 4294901760
    %v1161 = vsub.f32 %v62, %v1160
    %v1162 = vand.u32 %v1161, 4294901760
    %1163 = vmatpush1.msra.mxu0 %v1162
    %v1164 = vand.u32 %v59, 4294901760
    %v1165 = vsub.f32 %v59, %v1164
    %v1166 = vand.u32 %v1165, 4294901760
    %1167 = vmatprep.subr.mxu0 %v1166
    %v1168 = vand.u32 %v58, 4294901760
    %v1169 = vsub.f32 %v58, %v1168
    %v1170 = vand.u32 %v1169, 4294901760
    %1171 = vmatpush1.msra.mxu0 %v1170
    %1172 = vmatprep.subr.mxu0 0.0
    %1173 = vmatpush2.msra.mxu0 0.0
    %1174 = vmatprep.subr.mxu0 0.0
    %1175 = vmatpush2.msra.mxu0 0.0
    %1176 = vmatprep.subr.mxu0 0.0
    %1177 = vmatpush2.msra.mxu0 0.0
    %1178 = vmatprep.subr.mxu0 0.0
    %1179 = vmatpush2.msra.mxu0 0.0
    %1180 = vmatprep.subr.mxu0 0.0
    %1181 = vmatpush2.msra.mxu0 0.0
    %1182 = vmatprep.subr.mxu0 0.0
    %1183 = vmatpush2.msra.mxu0 0.0
    %1184 = vmatprep.subr.mxu0 0.0
    %1185 = vmatpush2.msra.mxu0 0.0
    %1186 = vmatprep.subr.mxu0 0.0
    %1187 = vmatpush2.msra.mxu0 0.0
    %1188 = vmatprep.subr.mxu0 0.0
    %1189 = vmatpush2.msra.mxu0 0.0
    %1190 = vmatprep.subr.mxu0 0.0
    %1191 = vmatpush2.msra.mxu0 0.0
    %1192 = vmatprep.subr.mxu0 0.0
    %1193 = vmatpush2.msra.mxu0 0.0
    %1194 = vmatprep.subr.mxu0 0.0
    %1195 = vmatpush2.msra.mxu0 0.0
    %1196 = vmatprep.subr.mxu0 0.0
    %1197 = vmatpush2.msra.mxu0 0.0
    %1198 = vmatprep.subr.mxu0 0.0
    %1199 = vmatpush2.msra.mxu0 0.0
    %1200 = vmatprep.subr.mxu0 0.0
    %1201 = vmatpush2.msra.mxu0 0.0
    %1202 = vmatprep.subr.mxu0 0.0
    %1203 = vmatpush2.msra.mxu0 0.0
    %1204 = vmatprep.mubr.f32.mxu0 0.0
    %v1205 = vand.u32 %v104, 4294901760
    %1206 = vmatmul.mubr.f32.gmra.mxu0 %v1205
    %v1207 = vpop.f32.mrf.mxu0
    %v1208 = vadd.f32 %v1100, %v1207
    %v1209 = vpop.f32.mrf.mxu0
    %v1210 = vadd.f32 %v1102, %v1209
    %1211 = vdwg.mxu0
    %1212 = vmatprep.subr.mxu0 0.0
    %1213 = vmatpush1.msra.mxu0 0.0
    %1214 = vmatprep.subr.mxu0 0.0
    %1215 = vmatpush1.msra.mxu0 0.0
    %1216 = vmatprep.subr.mxu0 0.0
    %1217 = vmatpush1.msra.mxu0 0.0
    %1218 = vmatprep.subr.mxu0 0.0
    %1219 = vmatpush1.msra.mxu0 0.0
    %1220 = vmatprep.subr.mxu0 0.0
    %1221 = vmatpush1.msra.mxu0 0.0
    %1222 = vmatprep.subr.mxu0 0.0
    %1223 = vmatpush1.msra.mxu0 0.0
    %1224 = vmatprep.subr.mxu0 0.0
    %1225 = vmatpush1.msra.mxu0 0.0
    %1226 = vmatprep.subr.mxu0 0.0
    %1227 = vmatpush1.msra.mxu0 0.0
    %1228 = vmatprep.subr.mxu0 0.0
    %1229 = vmatpush1.msra.mxu0 0.0
    %1230 = vmatprep.subr.mxu0 0.0
    %1231 = vmatpush1.msra.mxu0 0.0
    %v1232 = vand.u32 %v79, 4294901760
    %1233 = vmatprep.subr.mxu0 %v1232
    %v1234 = vand.u32 %v78, 4294901760
    %1235 = vmatpush1.msra.mxu0 %v1234
    %v1236 = vand.u32 %v75, 4294901760
    %1237 = vmatprep.subr.mxu0 %v1236
    %v1238 = vand.u32 %v74, 4294901760
    %1239 = vmatpush1.msra.mxu0 %v1238
    %v1240 = vand.u32 %v71, 4294901760
    %1241 = vmatprep.subr.mxu0 %v1240
    %v1242 = vand.u32 %v70, 4294901760
    %1243 = vmatpush1.msra.mxu0 %v1242
    %v1244 = vand.u32 %v67, 4294901760
    %1245 = vmatprep.subr.mxu0 %v1244
    %v1246 = vand.u32 %v66, 4294901760
    %1247 = vmatpush1.msra.mxu0 %v1246
    %v1248 = vand.u32 %v63, 4294901760
    %1249 = vmatprep.subr.mxu0 %v1248
    %v1250 = vand.u32 %v62, 4294901760
    %1251 = vmatpush1.msra.mxu0 %v1250
    %v1252 = vand.u32 %v59, 4294901760
    %1253 = vmatprep.subr.mxu0 %v1252
    %v1254 = vand.u32 %v58, 4294901760
    %1255 = vmatpush1.msra.mxu0 %v1254
    %1256 = vmatprep.subr.mxu0 0.0
    %1257 = vmatpush2.msra.mxu0 0.0
    %1258 = vmatprep.subr.mxu0 0.0
    %1259 = vmatpush2.msra.mxu0 0.0
    %1260 = vmatprep.subr.mxu0 0.0
    %1261 = vmatpush2.msra.mxu0 0.0
    %1262 = vmatprep.subr.mxu0 0.0
    %1263 = vmatpush2.msra.mxu0 0.0
    %1264 = vmatprep.subr.mxu0 0.0
    %1265 = vmatpush2.msra.mxu0 0.0
    %1266 = vmatprep.subr.mxu0 0.0
    %1267 = vmatpush2.msra.mxu0 0.0
    %1268 = vmatprep.subr.mxu0 0.0
    %1269 = vmatpush2.msra.mxu0 0.0
    %1270 = vmatprep.subr.mxu0 0.0
    %1271 = vmatpush2.msra.mxu0 0.0
    %1272 = vmatprep.subr.mxu0 0.0
    %1273 = vmatpush2.msra.mxu0 0.0
    %1274 = vmatprep.subr.mxu0 0.0
    %1275 = vmatpush2.msra.mxu0 0.0
    %1276 = vmatprep.subr.mxu0 0.0
    %1277 = vmatpush2.msra.mxu0 0.0
    %1278 = vmatprep.subr.mxu0 0.0
    %1279 = vmatpush2.msra.mxu0 0.0
    %1280 = vmatprep.subr.mxu0 0.0
    %1281 = vmatpush2.msra.mxu0 0.0
    %1282 = vmatprep.subr.mxu0 0.0
    %1283 = vmatpush2.msra.mxu0 0.0
    %1284 = vmatprep.subr.mxu0 0.0
    %1285 = vmatpush2.msra.mxu0 0.0
    %1286 = vmatprep.subr.mxu0 0.0
    %1287 = vmatpush2.msra.mxu0 0.0
    %1288 = vmatprep.mubr.f32.mxu0 0.0
    %v1289 = vand.u32 %v104, 4294901760
    %1290 = vmatmul.mubr.f32.gmra.mxu0 %v1289
    %v1291 = vpop.f32.mrf.mxu0
    %v1292 = vadd.f32 %v1208, %v1291
    %v1293 = vpop.f32.mrf.mxu0
    %v1294 = vadd.f32 %v1210, %v1293
    %1295 = vdwg.mxu0
    %v1296 = vxor.u32 %v697, 2147483648
    %v1297 = vmul.f32 %v1296, 1.442695
    %v1298 = vpow.pop %v1297
    %v1299 = vadd.f32 %v1298, 1.0
    %v1300 = vrcp.pop %v1299
    %v1301 = vmul.f32 1.0, %v1300
    %v1302 = vxor.u32 %v699, 2147483648
    %v1303 = vmul.f32 %v1302, 1.442695
    %v1304 = vpow.pop %v1303
    %v1305 = vadd.f32 %v1304, 1.0
    %v1306 = vrcp.pop %v1305
    %v1307 = vmul.f32 1.0, %v1306
    %v1308 = vmul.f32 %v1301, %v1294
    %v1309 = vadd.f32 %v1292, %v1308
    %v1310 = vtanh.pop %v1309
    %v1311 = vld [vmem:[#allocation5] sm:$0xff]
    %v1312 = vsub.f32 %v1311, %v1310
    %v1313 = vmul.f32 %v1307, %v1312
    %v1314 = vadd.f32 %v1310, %v1313
    %1315 = vst [vmem:[#allocation8] sm:$0xff] %v1314
    // Predicated region
    $region30: #{tpu_custom_call.1} parent=1 // pred_check
      _
    $region31: #{tpu_custom_call.1} parent=1 // pred_check_branch
      %1317 = sbr.rel (0) target = $region33
    $region32: #{tpu_custom_call.1} parent=1 // pred_region
      %s1319 = ssub.s32 128, 128
      %1320 = vsyncadd [#allocation4], %s1319
      %s1322 = sshll.u32 [#allocation8], 4
      %s1323 = int_to_ptr.vmem [resolvable:$true] %s1322
      %1325 = dma.vmem_to_hbm [thread:$0]  %s1323, 128, %s4, [#allocation4]
    $region33: #{tpu_custom_call.1} parent=1 // pred_fallthru
      _
    // Predicated region
    $region34: #{tpu_custom_call.1} parent=1 // pred_check
      _
    $region35: #{tpu_custom_call.1} parent=1 // pred_check_branch
      %1327 = sbr.rel (0) target = $region37
    $region36: #{tpu_custom_call.1} parent=1 // pred_region
      %1328 = dma.done [#allocation4], 128
    $region37: #{tpu_custom_call.1} parent=1 // pred_fallthru
      _
    %1329 = vsyncpa [#allocation3], 1
    %1330 = vsyncpa [#allocation6], 1
    %1331 = vsyncpa [#allocation4], 1

</llo_original>
